<compile_context>
chip_gen: v7x
topology: tpu7x:2x2x1
jax: 0.10.0
libtpu: 0.0.40
codegen_flags: <defaults>
</compile_context>

<pallas_src>
import functools
import math

import jax
import jax.numpy as jnp
from jax.experimental import pallas as pl
from jax.experimental.pallas import tpu as pltpu


def noun_classifier_kernel(ids_ref, table2_ref, w1_ref, b1_ref, w2_ref, b2_ref,
                           w3_ref, b3_ref, out_ref, *, n_dim: int):
    tile_b, seq_len = ids_ref.shape
    vocab = table2_ref.shape[0]

    ids = ids_ref[...]                                        # (TB, S) int32

    # --- per-example token counts: counts[b, v] = #{s : ids[b, s] == v} ------
    # Small-integer valued, exact in f32.  S is small -> static unroll keeps
    # everything 2-D / lane-dense (no 3-D relayout).
    vocab_iota = jax.lax.broadcasted_iota(jnp.int32, (tile_b, vocab), 1)
    counts = jnp.zeros((tile_b, vocab), jnp.float32)
    for s in range(seq_len):
        counts = counts + (ids[:, s:s + 1] == vocab_iota).astype(jnp.float32)

    # --- feat2 = counts @ (table * table) on the MXU --------------------------
    feat2 = jnp.dot(counts, table2_ref[...],
                    preferred_element_type=jnp.float32)        # (TB, D)

    # sqrt(n_dim) scale folded past the reduction:
    #   sqrt(sum((e*sqrt(D))**2)) == sqrt(D * sum(e**2))
    feat = jnp.sqrt(feat2 * jnp.float32(n_dim))                # (TB, D)

    # --- 3-layer MLP head (f32 MXU accumulation) ------------------------------
    h = jnp.dot(feat, w1_ref[...], preferred_element_type=jnp.float32) + b1_ref[...]
    h = jnp.maximum(h, 0.0)                                    # (TB, H)
    h = jnp.dot(h, w2_ref[...], preferred_element_type=jnp.float32) + b2_ref[...]
    h = jnp.maximum(h, 0.0)                                    # (TB, H)
    out_ref[...] = (jnp.dot(h, w3_ref[...], preferred_element_type=jnp.float32)
                    + b3_ref[...])                             # (TB, Cp) lane-dense


def _round_up(x: int, m: int) -> int:
    return -(-x // m) * m


def noun_classifier_forward(token_ids, emb_table, w1, b1, w2, b2, w3, b3,
                            *, tile_b=None):
    """token_ids: (B, S) int32; returns logits (B, n_classes) float32.

    Weights wi are already (in_features, out_features); biases bi are (1, out).
    """
    B, S = token_ids.shape
    V, D = emb_table.shape
    H = w1.shape[1]
    C = w3.shape[1]

    if tile_b is None:
        # >= 2 batch tiles so v7x megacore can split the grid; cap at 512 so
        # double-buffered activation tiles stay tiny vs. every generation's
        # VMEM (tightest: v5e 16 MiB scoped default, v7x 64 MiB physical).
        tile_b = min(512, _round_up(max(-(-B // 2), 8), 8))

    n_tiles = -(-B // tile_b)
    Bp = n_tiles * tile_b

    ids = token_ids.astype(jnp.int32)
    if Bp != B:
        ids = jnp.pad(ids, ((0, Bp - B), (0, 0)))   # pad rows use token 0; sliced off

    # Precompute table^2 once: feat2 = counts @ (table*table).
    table2 = (emb_table * emb_table).astype(jnp.float32)

    # Lane-dense logits: zero-pad n_classes to a multiple of 128 so the output
    # store is a full unmasked vst; slice [:, :C] afterwards.
    Cp = _round_up(max(C, 128), 128)
    w3p = jnp.pad(w3.astype(jnp.float32), ((0, 0), (0, Cp - C)))
    b3p = jnp.pad(b3.astype(jnp.float32).reshape(1, -1), ((0, 0), (0, Cp - C)))

    grid_spec = pltpu.PrefetchScalarGridSpec(
        num_scalar_prefetch=0,
        grid=(n_tiles,),
        in_specs=[
            pl.BlockSpec((tile_b, S), lambda i: (i, 0)),   # token ids (streamed, dense)
            pl.BlockSpec((V, D), lambda i: (0, 0)),        # table^2 (resident)
            pl.BlockSpec((D, H), lambda i: (0, 0)),        # W1
            pl.BlockSpec((1, H), lambda i: (0, 0)),        # b1
            pl.BlockSpec((H, H), lambda i: (0, 0)),        # W2
            pl.BlockSpec((1, H), lambda i: (0, 0)),        # b2
            pl.BlockSpec((H, Cp), lambda i: (0, 0)),       # W3 (lane-padded)
            pl.BlockSpec((1, Cp), lambda i: (0, 0)),       # b3 (lane-padded)
        ],
        out_specs=pl.BlockSpec((tile_b, Cp), lambda i: (i, 0)),
    )

    out = pl.pallas_call(
        functools.partial(noun_classifier_kernel, n_dim=D),
        out_shape=jax.ShapeDtypeStruct((Bp, Cp), jnp.float32),
        grid_spec=grid_spec,
        compiler_params=pltpu.CompilerParams(
            # Batch tiles are independent -> megacore split on v7x; no-op on
            # single-TC v5e/v6e.
            dimension_semantics=("parallel",),
            # Per-tile live set is a few hundred KiB; 32 MiB gives headroom on
            # every generation (v5e scoped default is only 16 MiB).
            vmem_limit_bytes=32 * 1024 * 1024,
        ),
    )(ids, table2, w1, b1, w2, b2, w3p, b3p)
    return out[:B, :C]


def reference_forward(token_ids, emb_table, w1, b1, w2, b2, w3, b3):
    """Pure-JAX reference mirroring the PyTorch module exactly."""
    n_dim = emb_table.shape[1]
    e = jnp.take(emb_table, token_ids, axis=0) * math.sqrt(n_dim)
    feat = jnp.sqrt(jnp.sum(e ** 2, axis=1))
    h = jax.nn.relu(feat @ w1 + b1)
    h = jax.nn.relu(h @ w2 + b2)
    return h @ w3 + b3


if __name__ == "__main__":
    # Small, module-consistent shapes.
    n_tokens, n_classes = 32, 8
    n_dim, n_hidden = 128, 32
    batch, seq = 16, 8

    key = jax.random.PRNGKey(0)
    k_emb, k_w1, k_b1, k_w2, k_b2, k_w3, k_b3, k_x = jax.random.split(key, 8)

    # PyTorch-like init: Embedding ~ N(0,1), Linear ~ U(-1/sqrt(fan_in), ...).
    # Weights stored transposed as (in, out) for the kernel.
    emb_table = jax.random.normal(k_emb, (n_tokens, n_dim), dtype=jnp.float32)

    def linear_init(kw, kb, fan_in, fan_out):
        bound = 1.0 / math.sqrt(fan_in)
        w = jax.random.uniform(kw, (fan_in, fan_out), jnp.float32, -bound, bound)
        b = jax.random.uniform(kb, (1, fan_out), jnp.float32, -bound, bound)
        return w, b

    w1, b1 = linear_init(k_w1, k_b1, n_dim, n_hidden)
    w2, b2 = linear_init(k_w2, k_b2, n_hidden, n_hidden)
    w3, b3 = linear_init(k_w3, k_b3, n_hidden, n_classes)

    token_ids = jax.random.randint(k_x, (batch, seq), 0, n_tokens, dtype=jnp.int32)

    # Default tile_b = round_up(ceil(B/2), 8) = 8 here -> a 2-step batch grid
    # (exercises the pipeline and the "parallel"/megacore batch axis).
    out = noun_classifier_forward(token_ids, emb_table, w1, b1, w2, b2, w3, b3)
    out = jax.block_until_ready(out)

    ref = reference_forward(token_ids, emb_table, w1, b1, w2, b2, w3, b3)
    assert out.shape == (batch, n_classes)
    assert jnp.allclose(out, ref, atol=2e-4, rtol=2e-4), "kernel/reference mismatch"

    print("KERNEL_OK")
</pallas_src>

<mosaic_0001>
module attributes {stable_mosaic.version = 11 : i64} {
  func.func @noun_classifier_kernel(%arg0: i32, %arg1: memref<8x8xi32, #tpu.memory_space<vmem>>, %arg2: memref<32x128xf32, #tpu.memory_space<vmem>>, %arg3: memref<128x32xf32, #tpu.memory_space<vmem>>, %arg4: memref<1x32xf32, #tpu.memory_space<vmem>>, %arg5: memref<32x32xf32, #tpu.memory_space<vmem>>, %arg6: memref<1x32xf32, #tpu.memory_space<vmem>>, %arg7: memref<32x128xf32, #tpu.memory_space<vmem>>, %arg8: memref<1x128xf32, #tpu.memory_space<vmem>>, %arg9: memref<8x128xf32, #tpu.memory_space<vmem>>) attributes {dimension_semantics = [#tpu.dimension_semantics<parallel>], iteration_bounds = array<i64: 2>, scalar_prefetch = 0 : i64, scratch_operands = 0 : i64, tpu.core_type = #tpu.core_type<tc>, window_params = [{transform_indices = @transform_0, window_bounds = array<i64: 8, 8>}, {pipeline_mode = #tpu.pipeline_mode<synchronous>, transform_indices = @transform_1, window_bounds = array<i64: 32, 128>}, {pipeline_mode = #tpu.pipeline_mode<synchronous>, transform_indices = @transform_2, window_bounds = array<i64: 128, 32>}, {pipeline_mode = #tpu.pipeline_mode<synchronous>, transform_indices = @transform_3, window_bounds = array<i64: 1, 32>}, {pipeline_mode = #tpu.pipeline_mode<synchronous>, transform_indices = @transform_4, window_bounds = array<i64: 32, 32>}, {pipeline_mode = #tpu.pipeline_mode<synchronous>, transform_indices = @transform_5, window_bounds = array<i64: 1, 32>}, {pipeline_mode = #tpu.pipeline_mode<synchronous>, transform_indices = @transform_6, window_bounds = array<i64: 32, 128>}, {pipeline_mode = #tpu.pipeline_mode<synchronous>, transform_indices = @transform_7, window_bounds = array<i64: 1, 128>}, {transform_indices = @transform_8, window_bounds = array<i64: 8, 128>}]} {
    %c0 = arith.constant 0 : index
    %c0_0 = arith.constant 0 : index
    %0 = vector.load %arg1[%c0, %c0_0] : memref<8x8xi32, #tpu.memory_space<vmem>>, vector<8x8xi32>
    %1 = tpu.iota {dimensions = array<i32: 1>} : vector<8x32xi32>
    %cst = arith.constant 0.000000e+00 : f32
    %2 = vector.broadcast %cst : f32 to vector<8x32xf32>
    %3 = vector.extract_strided_slice %0 {offsets = [0, 0], sizes = [8, 1], strides = [1, 1]} : vector<8x8xi32> to vector<8x1xi32>
    %4 = vector.broadcast %3 : vector<8x1xi32> to vector<8x32xi32>
    %5 = arith.cmpi eq, %4, %1 : vector<8x32xi32>
    %6 = arith.extui %5 : vector<8x32xi1> to vector<8x32xi32>
    %7 = arith.sitofp %6 : vector<8x32xi32> to vector<8x32xf32>
    %8 = arith.addf %2, %7 : vector<8x32xf32>
    %9 = vector.extract_strided_slice %0 {offsets = [0, 1], sizes = [8, 1], strides = [1, 1]} : vector<8x8xi32> to vector<8x1xi32>
    %10 = vector.broadcast %9 : vector<8x1xi32> to vector<8x32xi32>
    %11 = arith.cmpi eq, %10, %1 : vector<8x32xi32>
    %12 = arith.extui %11 : vector<8x32xi1> to vector<8x32xi32>
    %13 = arith.sitofp %12 : vector<8x32xi32> to vector<8x32xf32>
    %14 = arith.addf %8, %13 : vector<8x32xf32>
    %15 = vector.extract_strided_slice %0 {offsets = [0, 2], sizes = [8, 1], strides = [1, 1]} : vector<8x8xi32> to vector<8x1xi32>
    %16 = vector.broadcast %15 : vector<8x1xi32> to vector<8x32xi32>
    %17 = arith.cmpi eq, %16, %1 : vector<8x32xi32>
    %18 = arith.extui %17 : vector<8x32xi1> to vector<8x32xi32>
    %19 = arith.sitofp %18 : vector<8x32xi32> to vector<8x32xf32>
    %20 = arith.addf %14, %19 : vector<8x32xf32>
    %21 = vector.extract_strided_slice %0 {offsets = [0, 3], sizes = [8, 1], strides = [1, 1]} : vector<8x8xi32> to vector<8x1xi32>
    %22 = vector.broadcast %21 : vector<8x1xi32> to vector<8x32xi32>
    %23 = arith.cmpi eq, %22, %1 : vector<8x32xi32>
    %24 = arith.extui %23 : vector<8x32xi1> to vector<8x32xi32>
    %25 = arith.sitofp %24 : vector<8x32xi32> to vector<8x32xf32>
    %26 = arith.addf %20, %25 : vector<8x32xf32>
    %27 = vector.extract_strided_slice %0 {offsets = [0, 4], sizes = [8, 1], strides = [1, 1]} : vector<8x8xi32> to vector<8x1xi32>
    %28 = vector.broadcast %27 : vector<8x1xi32> to vector<8x32xi32>
    %29 = arith.cmpi eq, %28, %1 : vector<8x32xi32>
    %30 = arith.extui %29 : vector<8x32xi1> to vector<8x32xi32>
    %31 = arith.sitofp %30 : vector<8x32xi32> to vector<8x32xf32>
    %32 = arith.addf %26, %31 : vector<8x32xf32>
    %33 = vector.extract_strided_slice %0 {offsets = [0, 5], sizes = [8, 1], strides = [1, 1]} : vector<8x8xi32> to vector<8x1xi32>
    %34 = vector.broadcast %33 : vector<8x1xi32> to vector<8x32xi32>
    %35 = arith.cmpi eq, %34, %1 : vector<8x32xi32>
    %36 = arith.extui %35 : vector<8x32xi1> to vector<8x32xi32>
    %37 = arith.sitofp %36 : vector<8x32xi32> to vector<8x32xf32>
    %38 = arith.addf %32, %37 : vector<8x32xf32>
    %39 = vector.extract_strided_slice %0 {offsets = [0, 6], sizes = [8, 1], strides = [1, 1]} : vector<8x8xi32> to vector<8x1xi32>
    %40 = vector.broadcast %39 : vector<8x1xi32> to vector<8x32xi32>
    %41 = arith.cmpi eq, %40, %1 : vector<8x32xi32>
    %42 = arith.extui %41 : vector<8x32xi1> to vector<8x32xi32>
    %43 = arith.sitofp %42 : vector<8x32xi32> to vector<8x32xf32>
    %44 = arith.addf %38, %43 : vector<8x32xf32>
    %45 = vector.extract_strided_slice %0 {offsets = [0, 7], sizes = [8, 1], strides = [1, 1]} : vector<8x8xi32> to vector<8x1xi32>
    %46 = vector.broadcast %45 : vector<8x1xi32> to vector<8x32xi32>
    %47 = arith.cmpi eq, %46, %1 : vector<8x32xi32>
    %48 = arith.extui %47 : vector<8x32xi1> to vector<8x32xi32>
    %49 = arith.sitofp %48 : vector<8x32xi32> to vector<8x32xf32>
    %50 = arith.addf %44, %49 : vector<8x32xf32>
    %c0_1 = arith.constant 0 : index
    %c0_2 = arith.constant 0 : index
    %51 = vector.load %arg2[%c0_1, %c0_2] : memref<32x128xf32, #tpu.memory_space<vmem>>, vector<32x128xf32>
    %cst_3 = arith.constant dense<0.000000e+00> : vector<8x128xf32>
    %52 = tpu.matmul %50, %51, %cst_3 {dimension_numbers = #tpu.dot_dimension_numbers<[1], [0], [0], [1], [0, 0, 1, 1], [], []>} : vector<8x32xf32>, vector<32x128xf32>, vector<8x128xf32> -> vector<8x128xf32>
    %cst_4 = arith.constant 1.280000e+02 : f32
    %53 = vector.broadcast %cst_4 : f32 to vector<8x128xf32>
    %54 = arith.mulf %52, %53 : vector<8x128xf32>
    %55 = math.sqrt %54 : vector<8x128xf32>
    %c0_5 = arith.constant 0 : index
    %c0_6 = arith.constant 0 : index
    %56 = vector.load %arg3[%c0_5, %c0_6] : memref<128x32xf32, #tpu.memory_space<vmem>>, vector<128x32xf32>
    %cst_7 = arith.constant dense<0.000000e+00> : vector<8x32xf32>
    %57 = tpu.matmul %55, %56, %cst_7 {dimension_numbers = #tpu.dot_dimension_numbers<[1], [0], [0], [1], [0, 0, 1, 1], [], []>} : vector<8x128xf32>, vector<128x32xf32>, vector<8x32xf32> -> vector<8x32xf32>
    %c0_8 = arith.constant 0 : index
    %c0_9 = arith.constant 0 : index
    %58 = vector.load %arg4[%c0_8, %c0_9] : memref<1x32xf32, #tpu.memory_space<vmem>>, vector<1x32xf32>
    %59 = vector.broadcast %58 : vector<1x32xf32> to vector<8x32xf32>
    %60 = arith.addf %57, %59 : vector<8x32xf32>
    %cst_10 = arith.constant 0.000000e+00 : f32
    %61 = vector.broadcast %cst_10 : f32 to vector<8x32xf32>
    %62 = arith.maximumf %60, %61 : vector<8x32xf32>
    %c0_11 = arith.constant 0 : index
    %c0_12 = arith.constant 0 : index
    %63 = vector.load %arg5[%c0_11, %c0_12] : memref<32x32xf32, #tpu.memory_space<vmem>>, vector<32x32xf32>
    %cst_13 = arith.constant dense<0.000000e+00> : vector<8x32xf32>
    %64 = tpu.matmul %62, %63, %cst_13 {dimension_numbers = #tpu.dot_dimension_numbers<[1], [0], [0], [1], [0, 0, 1, 1], [], []>} : vector<8x32xf32>, vector<32x32xf32>, vector<8x32xf32> -> vector<8x32xf32>
    %c0_14 = arith.constant 0 : index
    %c0_15 = arith.constant 0 : index
    %65 = vector.load %arg6[%c0_14, %c0_15] : memref<1x32xf32, #tpu.memory_space<vmem>>, vector<1x32xf32>
    %66 = vector.broadcast %65 : vector<1x32xf32> to vector<8x32xf32>
    %67 = arith.addf %64, %66 : vector<8x32xf32>
    %cst_16 = arith.constant 0.000000e+00 : f32
    %68 = vector.broadcast %cst_16 : f32 to vector<8x32xf32>
    %69 = arith.maximumf %67, %68 : vector<8x32xf32>
    %c0_17 = arith.constant 0 : index
    %c0_18 = arith.constant 0 : index
    %70 = vector.load %arg7[%c0_17, %c0_18] : memref<32x128xf32, #tpu.memory_space<vmem>>, vector<32x128xf32>
    %cst_19 = arith.constant dense<0.000000e+00> : vector<8x128xf32>
    %71 = tpu.matmul %69, %70, %cst_19 {dimension_numbers = #tpu.dot_dimension_numbers<[1], [0], [0], [1], [0, 0, 1, 1], [], []>} : vector<8x32xf32>, vector<32x128xf32>, vector<8x128xf32> -> vector<8x128xf32>
    %c0_20 = arith.constant 0 : index
    %c0_21 = arith.constant 0 : index
    %72 = vector.load %arg8[%c0_20, %c0_21] : memref<1x128xf32, #tpu.memory_space<vmem>>, vector<1x128xf32>
    %73 = vector.broadcast %72 : vector<1x128xf32> to vector<8x128xf32>
    %74 = arith.addf %71, %73 : vector<8x128xf32>
    %c0_22 = arith.constant 0 : index
    %c0_23 = arith.constant 0 : index
    %75 = vector.load %arg9[%c0_22, %c0_23] : memref<8x128xf32, #tpu.memory_space<vmem>>, vector<8x128xf32>
    tpu.vector_store %arg9[%c0_22, %c0_23], %74 {strides = array<i32>} : memref<8x128xf32, #tpu.memory_space<vmem>>, vector<8x128xf32>,
    return
  }
  func.func @transform_0(%arg0: i32) -> (i32, i32) {
    %c0_i32 = arith.constant 0 : i32
    %c0_i32_0 = arith.constant 0 : i32
    return %arg0, %c0_i32 : i32, i32
  }
  func.func @transform_1(%arg0: i32) -> (i32, i32) {
    %c0_i32 = arith.constant 0 : i32
    %c0_i32_0 = arith.constant 0 : i32
    %c0_i32_1 = arith.constant 0 : i32
    return %c0_i32, %c0_i32_0 : i32, i32
  }
  func.func @transform_2(%arg0: i32) -> (i32, i32) {
    %c0_i32 = arith.constant 0 : i32
    %c0_i32_0 = arith.constant 0 : i32
    %c0_i32_1 = arith.constant 0 : i32
    return %c0_i32, %c0_i32_0 : i32, i32
  }
  func.func @transform_3(%arg0: i32) -> (i32, i32) {
    %c0_i32 = arith.constant 0 : i32
    %c0_i32_0 = arith.constant 0 : i32
    %c0_i32_1 = arith.constant 0 : i32
    return %c0_i32, %c0_i32_0 : i32, i32
  }
  func.func @transform_4(%arg0: i32) -> (i32, i32) {
    %c0_i32 = arith.constant 0 : i32
    %c0_i32_0 = arith.constant 0 : i32
    %c0_i32_1 = arith.constant 0 : i32
    return %c0_i32, %c0_i32_0 : i32, i32
  }
  func.func @transform_5(%arg0: i32) -> (i32, i32) {
    %c0_i32 = arith.constant 0 : i32
    %c0_i32_0 = arith.constant 0 : i32
    %c0_i32_1 = arith.constant 0 : i32
    return %c0_i32, %c0_i32_0 : i32, i32
  }
  func.func @transform_6(%arg0: i32) -> (i32, i32) {
    %c0_i32 = arith.constant 0 : i32
    %c0_i32_0 = arith.constant 0 : i32
    %c0_i32_1 = arith.constant 0 : i32
    return %c0_i32, %c0_i32_0 : i32, i32
  }
  func.func @transform_7(%arg0: i32) -> (i32, i32) {
    %c0_i32 = arith.constant 0 : i32
    %c0_i32_0 = arith.constant 0 : i32
    %c0_i32_1 = arith.constant 0 : i32
    return %c0_i32, %c0_i32_0 : i32, i32
  }
  func.func @transform_8(%arg0: i32) -> (i32, i32) {
    %c0_i32 = arith.constant 0 : i32
    %c0_i32_0 = arith.constant 0 : i32
    return %arg0, %c0_i32 : i32, i32
  }
}

</mosaic_0001>

<llo_original>
// kernel: tpu_custom_call.1
$region0: #{tpu_custom_call.1}
  #allocation0 [shape = 'u32[]', space=smem, size = 0x4, offset = 0x4, fixed_abs, tag = 'smem constant byte address 0x4 - core index']
  #allocation1 [shape = 'u32[144,128]{1,0:T(1,128)}', space=vmem, size = 0x12000, scoped, tag = 'internal scratch']
  %s0 = inlined_call_operand.vmem [shape: s32[16,8], index: 0, kind: input, shape index: {}]
  %s1 = inlined_call_operand.vmem [shape: f32[32,128], index: 1, kind: input, shape index: {}]
  %s2 = inlined_call_operand.vmem [shape: f32[128,32], index: 2, kind: input, shape index: {}]
  %s3 = inlined_call_operand.vmem [shape: f32[1,32], index: 3, kind: input, shape index: {}]
  %s4 = inlined_call_operand.vmem [shape: f32[32,32], index: 4, kind: input, shape index: {}]
  %s5 = inlined_call_operand.vmem [shape: f32[1,32], index: 5, kind: input, shape index: {}]
  %s6 = inlined_call_operand.vmem [shape: f32[32,128], index: 6, kind: input, shape index: {}]
  %s7 = inlined_call_operand.vmem [shape: f32[1,128], index: 7, kind: input, shape index: {}]
  %s8 = inlined_call_operand.hbm [shape: f32[16,128], index: 8, kind: output, shape index: {}]
  %s9 = sld [smem:[#allocation0]]
  $region65: #{tpu_custom_call.1} parent=0
    _
  %s11 = ssub.s32 1, %s9
  %s12 = scalar_select 0, %s11, %s9
  $region1: #{tpu_custom_call.1} parent=0
    #allocation2 [shape = 'u8[8192]{0}', space=vmem, size = 0x2000, scoped, tag = 'output window, operand 0']
    #allocation3 [shape = 's32[2]{0}', space=sflag, size = 0x8, scoped, tag = 'scoped memory for tpu_custom_call.1']
    %13 = vsyncpa [#allocation3], 0
    %s14 = scalar_lea.sflag [#allocation3], 1
    %15 = vsyncpa %s14, 0
    loop: start=0, step=1, limit=4
    $region2: #{tpu_custom_call.1} parent=1 // loop_pre_header
      _
    $region3: #{tpu_custom_call.1} parent=1 // loop_header
      %s17 = sphi 0, %s21
      %p18 = scmp.ge.s32.totalorder %s17, 4
      %s27 = sphi 0, %s29
      %s30 = sphi 0, %s27
      %s31 = sphi 0, %s30
      %s47 = sphi 0, %s31
      %s51 = sphi 0, %s51
      %s53 = sphi 0, %s51
      %s54 = sphi 0, %s53
      %s68 = sphi 0, %s54
      %s72 = sphi 0, %s72
      %s74 = sphi 0, %s72
      %s75 = sphi 0, %s74
      %s89 = sphi 0, %s75
      %s93 = sphi 0, %s93
      %s95 = sphi 0, %s93
      %s96 = sphi 0, %s95
      %s110 = sphi 0, %s96
      %s114 = sphi 0, %s114
      %s116 = sphi 0, %s114
      %s117 = sphi 0, %s116
      %s131 = sphi 0, %s117
      %s135 = sphi 0, %s135
      %s137 = sphi 0, %s135
      %s138 = sphi 0, %s137
      %s152 = sphi 0, %s138
      %s156 = sphi 0, %s156
      %s158 = sphi 0, %s156
      %s159 = sphi 0, %s158
      %s173 = sphi 0, %s159
      %s177 = sphi 0, %s177
      %s179 = sphi 0, %s177
      %s180 = sphi 0, %s179
      %s194 = sphi 0, %s180
      %s200 = sphi 0, %s202
      %s203 = sphi 0, %s200
      %s204 = sphi 0, %s203
      %s220 = sphi 0, %s204
    $region4: #{tpu_custom_call.1} parent=1 // loop_header_branch
      %20 = sbr.rel (%p18) target = $region8
    $region5: #{tpu_custom_call.1} parent=1 // loop_body
      %s22 = ssub.s32 %s17, 1
      %s23 = ssub.s32 %s17, 2
      %s24 = sadd.s32 %s17, 1
      %s25 = ssub.s32 %s17, %s24
      %p26 = scmp.eq.s32.totalorder %s25, 0
      %s28 = sadd.s32 %s27, 1
      %s29 = scalar_select %p26, %s27, %s28
      %p32 = pneg %p26
      %p33 = scmp.eq.s32.totalorder %s17, 1
      %p34 = por %p32, %p33
      %p35 = scmp.ne.s32.totalorder %s27, %s30
      %p36 = scmp.eq.s32.totalorder %s17, 0
      %p37 = por %p35, %p36
      %p38 = scmp.ne.s32.totalorder %s27, %s30
      %p39 = scmp.eq.s32.totalorder %s22, 1
      %p40 = por %p38, %p39
      %p41 = scmp.ne.s32.totalorder %s30, %s31
      %p42 = scmp.eq.s32.totalorder %s22, 0
      %p43 = por %p41, %p42
      %p44 = scmp.ne.s32.totalorder %s30, %s31
      %p45 = scmp.eq.s32.totalorder %s23, 1
      %p46 = por %p44, %p45
      %p48 = scmp.ne.s32.totalorder %s31, %s47
      %p49 = scmp.eq.s32.totalorder %s23, 0
      %p50 = por %p48, %p49
      %s52 = sadd.s32 %s51, 1
      %p55 = scmp.eq.s32.totalorder %s17, 1
      %p56 = scmp.ne.s32.totalorder %s51, %s53
      %p57 = scmp.eq.s32.totalorder %s17, 0
      %p58 = por %p56, %p57
      %p59 = scmp.ne.s32.totalorder %s51, %s53
      %p60 = scmp.eq.s32.totalorder %s22, 1
      %p61 = por %p59, %p60
      %p62 = scmp.ne.s32.totalorder %s53, %s54
      %p63 = scmp.eq.s32.totalorder %s22, 0
      %p64 = por %p62, %p63
      %p65 = scmp.ne.s32.totalorder %s53, %s54
      %p66 = scmp.eq.s32.totalorder %s23, 1
      %p67 = por %p65, %p66
      %p69 = scmp.ne.s32.totalorder %s54, %s68
      %p70 = scmp.eq.s32.totalorder %s23, 0
      %p71 = por %p69, %p70
      %s73 = sadd.s32 %s72, 1
      %p76 = scmp.eq.s32.totalorder %s17, 1
      %p77 = scmp.ne.s32.totalorder %s72, %s74
      %p78 = scmp.eq.s32.totalorder %s17, 0
      %p79 = por %p77, %p78
      %p80 = scmp.ne.s32.totalorder %s72, %s74
      %p81 = scmp.eq.s32.totalorder %s22, 1
      %p82 = por %p80, %p81
      %p83 = scmp.ne.s32.totalorder %s74, %s75
      %p84 = scmp.eq.s32.totalorder %s22, 0
      %p85 = por %p83, %p84
      %p86 = scmp.ne.s32.totalorder %s74, %s75
      %p87 = scmp.eq.s32.totalorder %s23, 1
      %p88 = por %p86, %p87
      %p90 = scmp.ne.s32.totalorder %s75, %s89
      %p91 = scmp.eq.s32.totalorder %s23, 0
      %p92 = por %p90, %p91
      %s94 = sadd.s32 %s93, 1
      %p97 = scmp.eq.s32.totalorder %s17, 1
      %p98 = scmp.ne.s32.totalorder %s93, %s95
      %p99 = scmp.eq.s32.totalorder %s17, 0
      %p100 = por %p98, %p99
      %p101 = scmp.ne.s32.totalorder %s93, %s95
      %p102 = scmp.eq.s32.totalorder %s22, 1
      %p103 = por %p101, %p102
      %p104 = scmp.ne.s32.totalorder %s95, %s96
      %p105 = scmp.eq.s32.totalorder %s22, 0
      %p106 = por %p104, %p105
      %p107 = scmp.ne.s32.totalorder %s95, %s96
      %p108 = scmp.eq.s32.totalorder %s23, 1
      %p109 = por %p107, %p108
      %p111 = scmp.ne.s32.totalorder %s96, %s110
      %p112 = scmp.eq.s32.totalorder %s23, 0
      %p113 = por %p111, %p112
      %s115 = sadd.s32 %s114, 1
      %p118 = scmp.eq.s32.totalorder %s17, 1
      %p119 = scmp.ne.s32.totalorder %s114, %s116
      %p120 = scmp.eq.s32.totalorder %s17, 0
      %p121 = por %p119, %p120
      %p122 = scmp.ne.s32.totalorder %s114, %s116
      %p123 = scmp.eq.s32.totalorder %s22, 1
      %p124 = por %p122, %p123
      %p125 = scmp.ne.s32.totalorder %s116, %s117
      %p126 = scmp.eq.s32.totalorder %s22, 0
      %p127 = por %p125, %p126
      %p128 = scmp.ne.s32.totalorder %s116, %s117
      %p129 = scmp.eq.s32.totalorder %s23, 1
      %p130 = por %p128, %p129
      %p132 = scmp.ne.s32.totalorder %s117, %s131
      %p133 = scmp.eq.s32.totalorder %s23, 0
      %p134 = por %p132, %p133
      %s136 = sadd.s32 %s135, 1
      %p139 = scmp.eq.s32.totalorder %s17, 1
      %p140 = scmp.ne.s32.totalorder %s135, %s137
      %p141 = scmp.eq.s32.totalorder %s17, 0
      %p142 = por %p140, %p141
      %p143 = scmp.ne.s32.totalorder %s135, %s137
      %p144 = scmp.eq.s32.totalorder %s22, 1
      %p145 = por %p143, %p144
      %p146 = scmp.ne.s32.totalorder %s137, %s138
      %p147 = scmp.eq.s32.totalorder %s22, 0
      %p148 = por %p146, %p147
      %p149 = scmp.ne.s32.totalorder %s137, %s138
      %p150 = scmp.eq.s32.totalorder %s23, 1
      %p151 = por %p149, %p150
      %p153 = scmp.ne.s32.totalorder %s138, %s152
      %p154 = scmp.eq.s32.totalorder %s23, 0
      %p155 = por %p153, %p154
      %s157 = sadd.s32 %s156, 1
      %p160 = scmp.eq.s32.totalorder %s17, 1
      %p161 = scmp.ne.s32.totalorder %s156, %s158
      %p162 = scmp.eq.s32.totalorder %s17, 0
      %p163 = por %p161, %p162
      %p164 = scmp.ne.s32.totalorder %s156, %s158
      %p165 = scmp.eq.s32.totalorder %s22, 1
      %p166 = por %p164, %p165
      %p167 = scmp.ne.s32.totalorder %s158, %s159
      %p168 = scmp.eq.s32.totalorder %s22, 0
      %p169 = por %p167, %p168
      %p170 = scmp.ne.s32.totalorder %s158, %s159
      %p171 = scmp.eq.s32.totalorder %s23, 1
      %p172 = por %p170, %p171
      %p174 = scmp.ne.s32.totalorder %s159, %s173
      %p175 = scmp.eq.s32.totalorder %s23, 0
      %p176 = por %p174, %p175
      %s178 = sadd.s32 %s177, 1
      %p181 = scmp.eq.s32.totalorder %s17, 1
      %p182 = scmp.ne.s32.totalorder %s177, %s179
      %p183 = scmp.eq.s32.totalorder %s17, 0
      %p184 = por %p182, %p183
      %p185 = scmp.ne.s32.totalorder %s177, %s179
      %p186 = scmp.eq.s32.totalorder %s22, 1
      %p187 = por %p185, %p186
      %p188 = scmp.ne.s32.totalorder %s179, %s180
      %p189 = scmp.eq.s32.totalorder %s22, 0
      %p190 = por %p188, %p189
      %p191 = scmp.ne.s32.totalorder %s179, %s180
      %p192 = scmp.eq.s32.totalorder %s23, 1
      %p193 = por %p191, %p192
      %p195 = scmp.ne.s32.totalorder %s180, %s194
      %p196 = scmp.eq.s32.totalorder %s23, 0
      %p197 = por %p195, %p196
      %s198 = ssub.s32 %s17, %s24
      %p199 = scmp.eq.s32.totalorder %s198, 0
      %s201 = sadd.s32 %s200, 1
      %s202 = scalar_select %p199, %s200, %s201
      %p205 = pneg %p199
      %p206 = scmp.eq.s32.totalorder %s17, 1
      %p207 = por %p205, %p206
      %p208 = scmp.ne.s32.totalorder %s200, %s203
      %p209 = scmp.eq.s32.totalorder %s17, 0
      %p210 = por %p208, %p209
      %p211 = scmp.ne.s32.totalorder %s200, %s203
      %p212 = scmp.eq.s32.totalorder %s22, 1
      %p213 = por %p211, %p212
      %p214 = scmp.ne.s32.totalorder %s203, %s204
      %p215 = scmp.eq.s32.totalorder %s22, 0
      %p216 = por %p214, %p215
      %p217 = scmp.ne.s32.totalorder %s203, %s204
      %p218 = scmp.eq.s32.totalorder %s23, 1
      %p219 = por %p217, %p218
      %p221 = scmp.ne.s32.totalorder %s204, %s220
      %p222 = scmp.eq.s32.totalorder %s23, 0
      %p223 = por %p221, %p222
      %p224 = scmp.le.s32.totalorder 1, %s17
      %p225 = scmp.lt.s32.totalorder %s17, 3
      %p226 = pnand %p224, %p225
      %p227 = pneg %p226
      // Predicated region
      $region9: #{tpu_custom_call.1} parent=5 // pred_check
        _
      $region10: #{tpu_custom_call.1} parent=5 // pred_check_branch
        %229 = sbr.rel (%p226) target = $region12
      $region11: #{tpu_custom_call.1} parent=5 // pred_region
        %s230 = ssub.s32 %s17, 1
        // Predicated region
        $region13: #{tpu_custom_call.1} parent=11 // pred_check
          %p231 = pneg %p64
        $region14: #{tpu_custom_call.1} parent=11 // pred_check_branch
          %233 = sbr.rel (%p231) target = $region16
        $region15: #{tpu_custom_call.1} parent=11 // pred_region
          _
        $region16: #{tpu_custom_call.1} parent=11 // pred_fallthru
          _
        // Predicated region
        $region17: #{tpu_custom_call.1} parent=11 // pred_check
          %p234 = pneg %p85
        $region18: #{tpu_custom_call.1} parent=11 // pred_check_branch
          %236 = sbr.rel (%p234) target = $region20
        $region19: #{tpu_custom_call.1} parent=11 // pred_region
          _
        $region20: #{tpu_custom_call.1} parent=11 // pred_fallthru
          _
        // Predicated region
        $region21: #{tpu_custom_call.1} parent=11 // pred_check
          %p237 = pneg %p106
        $region22: #{tpu_custom_call.1} parent=11 // pred_check_branch
          %239 = sbr.rel (%p237) target = $region24
        $region23: #{tpu_custom_call.1} parent=11 // pred_region
          _
        $region24: #{tpu_custom_call.1} parent=11 // pred_fallthru
          _
        // Predicated region
        $region25: #{tpu_custom_call.1} parent=11 // pred_check
          %p240 = pneg %p127
        $region26: #{tpu_custom_call.1} parent=11 // pred_check_branch
          %242 = sbr.rel (%p240) target = $region28
        $region27: #{tpu_custom_call.1} parent=11 // pred_region
          _
        $region28: #{tpu_custom_call.1} parent=11 // pred_fallthru
          _
        // Predicated region
        $region29: #{tpu_custom_call.1} parent=11 // pred_check
          %p243 = pneg %p148
        $region30: #{tpu_custom_call.1} parent=11 // pred_check_branch
          %245 = sbr.rel (%p243) target = $region32
        $region31: #{tpu_custom_call.1} parent=11 // pred_region
          _
        $region32: #{tpu_custom_call.1} parent=11 // pred_fallthru
          _
        // Predicated region
        $region33: #{tpu_custom_call.1} parent=11 // pred_check
          %p246 = pneg %p169
        $region34: #{tpu_custom_call.1} parent=11 // pred_check_branch
          %248 = sbr.rel (%p246) target = $region36
        $region35: #{tpu_custom_call.1} parent=11 // pred_region
          _
        $region36: #{tpu_custom_call.1} parent=11 // pred_fallthru
          _
        // Predicated region
        $region37: #{tpu_custom_call.1} parent=11 // pred_check
          %p249 = pneg %p190
        $region38: #{tpu_custom_call.1} parent=11 // pred_check_branch
          %251 = sbr.rel (%p249) target = $region40
        $region39: #{tpu_custom_call.1} parent=11 // pred_region
          _
        $region40: #{tpu_custom_call.1} parent=11 // pred_fallthru
          _
      $region12: #{tpu_custom_call.1} parent=5 // pred_fallthru
        _
      %p252 = scmp.lt.s32.totalorder %s17, 2
      // Predicated region
      $region41: #{tpu_custom_call.1} parent=5 // pred_check
        %p253 = pneg %p252
      $region42: #{tpu_custom_call.1} parent=5 // pred_check_branch
        %255 = sbr.rel (%p253) target = $region44
      $region43: #{tpu_custom_call.1} parent=5 // pred_region
        // Predicated region
        $region45: #{tpu_custom_call.1} parent=43 // pred_check
          %p256 = pneg %p37
        $region46: #{tpu_custom_call.1} parent=43 // pred_check_branch
          %258 = sbr.rel (%p256) target = $region48
        $region47: #{tpu_custom_call.1} parent=43 // pred_region
          %p259 = scmp.lt.s32.totalorder %s17, 1
          %s260 = scalar_select %p259, %s17, 1
          %s261 = smul.addr %s260, 8
          %s262 = scalar_lea.vmem %s0, %s261
        $region48: #{tpu_custom_call.1} parent=43 // pred_fallthru
          _
      $region44: #{tpu_custom_call.1} parent=5 // pred_fallthru
        _
      %p263 = scmp.le.s32.totalorder 1, %s17
      %p264 = scmp.lt.s32.totalorder %s17, 3
      %p265 = pnand %p263, %p264
      %p266 = pneg %p265
      // Predicated region
      $region49: #{tpu_custom_call.1} parent=5 // pred_check
        _
      $region50: #{tpu_custom_call.1} parent=5 // pred_check_branch
        %268 = sbr.rel (%p265) target = $region52
      $region51: #{tpu_custom_call.1} parent=5 // pred_region
        %s269 = ssub.s32 %s17, 1
        %p270 = scmp.lt.s32.totalorder %s22, 1
        %s271 = scalar_select %p270, %s22, 1
        %s272 = smul.addr %s271, 8
        %s273 = scalar_lea.vmem %s0, %s272
        %p274 = pneg %p43
        %p275 = pneg %p40
        %p276 = pneg %p64
        %p277 = pneg %p61
        %p278 = pneg %p85
        %p279 = pneg %p82
        %p280 = pneg %p106
        %p281 = pneg %p103
        %p282 = pneg %p127
        %p283 = pneg %p124
        %p284 = pneg %p148
        %p285 = pneg %p145
        %p286 = pneg %p169
        %p287 = pneg %p166
        %p288 = pneg %p190
        %p289 = pneg %p187
        %p290 = pneg %p216
        %p291 = pneg %p213
        %s292 = sand.u32 %s203, 1
        %s293 = scalar_lea.sflag [#allocation3], %s292
        %s294 = sand.u32 %s203, 1
        %s295 = smul.addr %s294, 8
        %s296 = scalar_lea.vmem [#allocation2], %s295
        %p297 = scmp.lt.s32.totalorder %s22, 1
        %s298 = scalar_select %p297, %s22, 1
        %s299 = smul.addr %s298, 8
        %s300 = scalar_lea.vmem %s0, %s299
        %v301 = vld [vmem:[%s300] sm:$0xff]
        %v302 = vlaneseq
        %v303 = vand.u32 %v302, 127
        %304 = vset.pattern.permute.xlu0 0
        %305 = vperm.xlu0 %304, %v301
        %v306 = vpop.permute.xlu0 %305
        %vm307 = vcmp.eq.s32.totalorder %v306, %v303
        %v308 = vsel %vm307, 1, 0
        %v309 = vcvt.s32.f32 %v308
        %v310 = vadd.f32 %v309, 0.0
        %311 = vset.pattern.permute.xlu0 1
        %312 = vperm.xlu0 %311, %v301
        %v313 = vpop.permute.xlu0 %312
        %vm314 = vcmp.eq.s32.totalorder %v313, %v303
        %v315 = vsel %vm314, 1, 0
        %v316 = vcvt.s32.f32 %v315
        %v317 = vadd.f32 %v310, %v316
        %318 = vset.pattern.permute.xlu0 2
        %319 = vperm.xlu0 %318, %v301
        %v320 = vpop.permute.xlu0 %319
        %vm321 = vcmp.eq.s32.totalorder %v320, %v303
        %v322 = vsel %vm321, 1, 0
        %v323 = vcvt.s32.f32 %v322
        %v324 = vadd.f32 %v317, %v323
        %325 = vset.pattern.permute.xlu0 3
        %326 = vperm.xlu0 %325, %v301
        %v327 = vpop.permute.xlu0 %326
        %vm328 = vcmp.eq.s32.totalorder %v327, %v303
        %v329 = vsel %vm328, 1, 0
        %v330 = vcvt.s32.f32 %v329
        %v331 = vadd.f32 %v324, %v330
        %332 = vset.pattern.permute.xlu0 4
        %333 = vperm.xlu0 %332, %v301
        %v334 = vpop.permute.xlu0 %333
        %vm335 = vcmp.eq.s32.totalorder %v334, %v303
        %v336 = vsel %vm335, 1, 0
        %v337 = vcvt.s32.f32 %v336
        %v338 = vadd.f32 %v331, %v337
        %339 = vset.pattern.permute.xlu0 5
        %340 = vperm.xlu0 %339, %v301
        %v341 = vpop.permute.xlu0 %340
        %vm342 = vcmp.eq.s32.totalorder %v341, %v303
        %v343 = vsel %vm342, 1, 0
        %v344 = vcvt.s32.f32 %v343
        %v345 = vadd.f32 %v338, %v344
        %346 = vset.pattern.permute.xlu0 6
        %347 = vperm.xlu0 %346, %v301
        %v348 = vpop.permute.xlu0 %347
        %vm349 = vcmp.eq.s32.totalorder %v348, %v303
        %v350 = vsel %vm349, 1, 0
        %v351 = vcvt.s32.f32 %v350
        %v352 = vadd.f32 %v345, %v351
        %353 = vset.pattern.permute.xlu0 7
        %354 = vperm.xlu0 %353, %v301
        %v355 = vpop.permute.xlu0 %354
        %vm356 = vcmp.eq.s32.totalorder %v355, %v303
        %v357 = vsel %vm356, 1, 0
        %v358 = vcvt.s32.f32 %v357
        %v359 = vadd.f32 %v352, %v358
        %v360 = vld [vmem:[%s1] sm:$0xff]
        %v361 = vld [vmem:[%s1 + $0x8] sm:$0xff]
        %v362 = vld [vmem:[%s1 + $0x10] sm:$0xff]
        %v363 = vld [vmem:[%s1 + $0x18] sm:$0xff]
        %vm364 = vcmask 261120
        %v366 = vsel %vm364, %v359, 0
        %368 = vmatprep.subr.mxu0 0.0
        %369 = vmatpush1.msra.mxu0 %v360
        %370 = vmatprep.subr.mxu0 0.0
        %371 = vmatpush1.msra.mxu0 %v361
        %372 = vmatprep.subr.mxu0 0.0
        %373 = vmatpush1.msra.mxu0 %v362
        %374 = vmatprep.subr.mxu0 0.0
        %375 = vmatpush1.msra.mxu0 %v363
        %376 = vmatprep.subr.mxu0 0.0
        %377 = vmatpush1.msra.mxu0 0.0
        %378 = vmatprep.subr.mxu0 0.0
        %379 = vmatpush1.msra.mxu0 0.0
        %380 = vmatprep.subr.mxu0 0.0
        %381 = vmatpush1.msra.mxu0 0.0
        %382 = vmatprep.subr.mxu0 0.0
        %383 = vmatpush1.msra.mxu0 0.0
        %384 = vmatprep.subr.mxu0 0.0
        %385 = vmatpush1.msra.mxu0 0.0
        %386 = vmatprep.subr.mxu0 0.0
        %387 = vmatpush1.msra.mxu0 0.0
        %388 = vmatprep.subr.mxu0 0.0
        %389 = vmatpush1.msra.mxu0 0.0
        %390 = vmatprep.subr.mxu0 0.0
        %391 = vmatpush1.msra.mxu0 0.0
        %392 = vmatprep.subr.mxu0 0.0
        %393 = vmatpush1.msra.mxu0 0.0
        %394 = vmatprep.subr.mxu0 0.0
        %395 = vmatpush1.msra.mxu0 0.0
        %396 = vmatprep.subr.mxu0 0.0
        %397 = vmatpush1.msra.mxu0 0.0
        %398 = vmatprep.subr.mxu0 0.0
        %399 = vmatpush1.msra.mxu0 0.0
        %400 = vmatprep.subr.mxu0 0.0
        %401 = vmatpush1.msra.mxu0 0.0
        %402 = vmatprep.subr.mxu0 0.0
        %403 = vmatpush1.msra.mxu0 0.0
        %404 = vmatprep.subr.mxu0 0.0
        %405 = vmatpush1.msra.mxu0 0.0
        %406 = vmatprep.subr.mxu0 0.0
        %407 = vmatpush1.msra.mxu0 0.0
        %408 = vmatprep.subr.mxu0 0.0
        %409 = vmatpush1.msra.mxu0 0.0
        %410 = vmatprep.subr.mxu0 0.0
        %411 = vmatpush1.msra.mxu0 0.0
        %412 = vmatprep.subr.mxu0 0.0
        %413 = vmatpush1.msra.mxu0 0.0
        %414 = vmatprep.subr.mxu0 0.0
        %415 = vmatpush1.msra.mxu0 0.0
        %416 = vmatprep.subr.mxu0 0.0
        %417 = vmatpush1.msra.mxu0 0.0
        %418 = vmatprep.subr.mxu0 0.0
        %419 = vmatpush1.msra.mxu0 0.0
        %420 = vmatprep.subr.mxu0 0.0
        %421 = vmatpush1.msra.mxu0 0.0
        %422 = vmatprep.subr.mxu0 0.0
        %423 = vmatpush1.msra.mxu0 0.0
        %424 = vmatprep.subr.mxu0 0.0
        %425 = vmatpush1.msra.mxu0 0.0
        %426 = vmatprep.subr.mxu0 0.0
        %427 = vmatpush1.msra.mxu0 0.0
        %428 = vmatprep.subr.mxu0 0.0
        %429 = vmatpush1.msra.mxu0 0.0
        %430 = vmatprep.subr.mxu0 0.0
        %431 = vmatpush1.msra.mxu0 0.0
        %432 = vmatprep.mubr.f32.mxu0 0.0
        %433 = vmatmul.mubr.f32.gmra.mrb[0].mxu0 %v366
        %v434 = vpop.f32.mrb[0].mxu0
        %v435 = vadd.f32 0.0, %v434
        %v436 = vpop.f32.mrb[0].mxu0
        %437 = vdwg.mxu0
        %v438 = vmul.f32 %v435, 128.0
        %v439 = vrsqrt.pop %v438
        %v440 = vmul.f32 %v438, %v439
        %vm441 = vcmp.eq.f32.partialorder %v438, inf
        %v442 = vsel %vm441, %v438, %v440
        %vm443 = vcmp.eq.f32.partialorder %v438, 0.0
        %v444 = vand.u32 %v438, 2147483648
        %v445 = vsel %vm443, %v444, %v442
        %v446 = vld [vmem:[%s2] sm:$0xff]
        %v447 = vld [vmem:[%s2 + $0x8] sm:$0xff]
        %v448 = vld [vmem:[%s2 + $0x10] sm:$0xff]
        %v449 = vld [vmem:[%s2 + $0x18] sm:$0xff]
        %v450 = vld [vmem:[%s2 + $0x20] sm:$0xff]
        %v451 = vld [vmem:[%s2 + $0x28] sm:$0xff]
        %v452 = vld [vmem:[%s2 + $0x30] sm:$0xff]
        %v453 = vld [vmem:[%s2 + $0x38] sm:$0xff]
        %v454 = vld [vmem:[%s2 + $0x40] sm:$0xff]
        %v455 = vld [vmem:[%s2 + $0x48] sm:$0xff]
        %v456 = vld [vmem:[%s2 + $0x50] sm:$0xff]
        %v457 = vld [vmem:[%s2 + $0x58] sm:$0xff]
        %v458 = vld [vmem:[%s2 + $0x60] sm:$0xff]
        %v459 = vld [vmem:[%s2 + $0x68] sm:$0xff]
        %v460 = vld [vmem:[%s2 + $0x70] sm:$0xff]
        %v461 = vld [vmem:[%s2 + $0x78] sm:$0xff]
        %v462 = vld [vmem:[%s3] sm:$0x1]
        %v464 = vlaneseq
        %v465 = vshrl.u32 %v464, 7
        %v466 = vsub.s32 0, %v465
        %v467 = vrot.slane %v462, %v466
        %469 = vmatprep.subr.mxu0 0.0
        %470 = vmatpush1.msra.mxu0 %v446
        %471 = vmatprep.subr.mxu0 0.0
        %472 = vmatpush1.msra.mxu0 %v447
        %473 = vmatprep.subr.mxu0 0.0
        %474 = vmatpush1.msra.mxu0 %v448
        %475 = vmatprep.subr.mxu0 0.0
        %476 = vmatpush1.msra.mxu0 %v449
        %477 = vmatprep.subr.mxu0 0.0
        %478 = vmatpush1.msra.mxu0 %v450
        %479 = vmatprep.subr.mxu0 0.0
        %480 = vmatpush1.msra.mxu0 %v451
        %481 = vmatprep.subr.mxu0 0.0
        %482 = vmatpush1.msra.mxu0 %v452
        %483 = vmatprep.subr.mxu0 0.0
        %484 = vmatpush1.msra.mxu0 %v453
        %485 = vmatprep.subr.mxu0 0.0
        %486 = vmatpush1.msra.mxu0 %v454
        %487 = vmatprep.subr.mxu0 0.0
        %488 = vmatpush1.msra.mxu0 %v455
        %489 = vmatprep.subr.mxu0 0.0
        %490 = vmatpush1.msra.mxu0 %v456
        %491 = vmatprep.subr.mxu0 0.0
        %492 = vmatpush1.msra.mxu0 %v457
        %493 = vmatprep.subr.mxu0 0.0
        %494 = vmatpush1.msra.mxu0 %v458
        %495 = vmatprep.subr.mxu0 0.0
        %496 = vmatpush1.msra.mxu0 %v459
        %497 = vmatprep.subr.mxu0 0.0
        %498 = vmatpush1.msra.mxu0 %v460
        %499 = vmatprep.subr.mxu0 0.0
        %500 = vmatpush1.msra.mxu0 %v461
        %501 = vmatprep.subr.mxu0 0.0
        %502 = vmatpush1.msra.mxu0 0.0
        %503 = vmatprep.subr.mxu0 0.0
        %504 = vmatpush1.msra.mxu0 0.0
        %505 = vmatprep.subr.mxu0 0.0
        %506 = vmatpush1.msra.mxu0 0.0
        %507 = vmatprep.subr.mxu0 0.0
        %508 = vmatpush1.msra.mxu0 0.0
        %509 = vmatprep.subr.mxu0 0.0
        %510 = vmatpush1.msra.mxu0 0.0
        %511 = vmatprep.subr.mxu0 0.0
        %512 = vmatpush1.msra.mxu0 0.0
        %513 = vmatprep.subr.mxu0 0.0
        %514 = vmatpush1.msra.mxu0 0.0
        %515 = vmatprep.subr.mxu0 0.0
        %516 = vmatpush1.msra.mxu0 0.0
        %517 = vmatprep.subr.mxu0 0.0
        %518 = vmatpush1.msra.mxu0 0.0
        %519 = vmatprep.subr.mxu0 0.0
        %520 = vmatpush1.msra.mxu0 0.0
        %521 = vmatprep.subr.mxu0 0.0
        %522 = vmatpush1.msra.mxu0 0.0
        %523 = vmatprep.subr.mxu0 0.0
        %524 = vmatpush1.msra.mxu0 0.0
        %525 = vmatprep.subr.mxu0 0.0
        %526 = vmatpush1.msra.mxu0 0.0
        %527 = vmatprep.subr.mxu0 0.0
        %528 = vmatpush1.msra.mxu0 0.0
        %529 = vmatprep.subr.mxu0 0.0
        %530 = vmatpush1.msra.mxu0 0.0
        %531 = vmatprep.subr.mxu0 0.0
        %532 = vmatpush1.msra.mxu0 0.0
        %533 = vmatprep.mubr.f32.mxu0 0.0
        %534 = vmatmul.mubr.f32.gmra.mrb[0].mxu0 %v445
        %v535 = vpop.f32.mrb[0].mxu0
        %v536 = vadd.f32 %v467, %v535
        %v537 = vpop.f32.mrb[0].mxu0
        %538 = vdwg.mxu0
        %v539 = vmax.f32 %v536, 0.0
        %v540 = vld [vmem:[%s4] sm:$0xff]
        %v541 = vld [vmem:[%s4 + $0x8] sm:$0xff]
        %v542 = vld [vmem:[%s4 + $0x10] sm:$0xff]
        %v543 = vld [vmem:[%s4 + $0x18] sm:$0xff]
        %v544 = vld [vmem:[%s5] sm:$0x1]
        %v546 = vlaneseq
        %v547 = vshrl.u32 %v546, 7
        %v548 = vsub.s32 0, %v547
        %v549 = vrot.slane %v544, %v548
        %v552 = vsel %vm364, %v539, 0
        %554 = vmatprep.subr.mxu0 0.0
        %555 = vmatpush1.msra.mxu0 %v540
        %556 = vmatprep.subr.mxu0 0.0
        %557 = vmatpush1.msra.mxu0 %v541
        %558 = vmatprep.subr.mxu0 0.0
        %559 = vmatpush1.msra.mxu0 %v542
        %560 = vmatprep.subr.mxu0 0.0
        %561 = vmatpush1.msra.mxu0 %v543
        %562 = vmatprep.subr.mxu0 0.0
        %563 = vmatpush1.msra.mxu0 0.0
        %564 = vmatprep.subr.mxu0 0.0
        %565 = vmatpush1.msra.mxu0 0.0
        %566 = vmatprep.subr.mxu0 0.0
        %567 = vmatpush1.msra.mxu0 0.0
        %568 = vmatprep.subr.mxu0 0.0
        %569 = vmatpush1.msra.mxu0 0.0
        %570 = vmatprep.subr.mxu0 0.0
        %571 = vmatpush1.msra.mxu0 0.0
        %572 = vmatprep.subr.mxu0 0.0
        %573 = vmatpush1.msra.mxu0 0.0
        %574 = vmatprep.subr.mxu0 0.0
        %575 = vmatpush1.msra.mxu0 0.0
        %576 = vmatprep.subr.mxu0 0.0
        %577 = vmatpush1.msra.mxu0 0.0
        %578 = vmatprep.subr.mxu0 0.0
        %579 = vmatpush1.msra.mxu0 0.0
        %580 = vmatprep.subr.mxu0 0.0
        %581 = vmatpush1.msra.mxu0 0.0
        %582 = vmatprep.subr.mxu0 0.0
        %583 = vmatpush1.msra.mxu0 0.0
        %584 = vmatprep.subr.mxu0 0.0
        %585 = vmatpush1.msra.mxu0 0.0
        %586 = vmatprep.subr.mxu0 0.0
        %587 = vmatpush1.msra.mxu0 0.0
        %588 = vmatprep.subr.mxu0 0.0
        %589 = vmatpush1.msra.mxu0 0.0
        %590 = vmatprep.subr.mxu0 0.0
        %591 = vmatpush1.msra.mxu0 0.0
        %592 = vmatprep.subr.mxu0 0.0
        %593 = vmatpush1.msra.mxu0 0.0
        %594 = vmatprep.subr.mxu0 0.0
        %595 = vmatpush1.msra.mxu0 0.0
        %596 = vmatprep.subr.mxu0 0.0
        %597 = vmatpush1.msra.mxu0 0.0
        %598 = vmatprep.subr.mxu0 0.0
        %599 = vmatpush1.msra.mxu0 0.0
        %600 = vmatprep.subr.mxu0 0.0
        %601 = vmatpush1.msra.mxu0 0.0
        %602 = vmatprep.subr.mxu0 0.0
        %603 = vmatpush1.msra.mxu0 0.0
        %604 = vmatprep.subr.mxu0 0.0
        %605 = vmatpush1.msra.mxu0 0.0
        %606 = vmatprep.subr.mxu0 0.0
        %607 = vmatpush1.msra.mxu0 0.0
        %608 = vmatprep.subr.mxu0 0.0
        %609 = vmatpush1.msra.mxu0 0.0
        %610 = vmatprep.subr.mxu0 0.0
        %611 = vmatpush1.msra.mxu0 0.0
        %612 = vmatprep.subr.mxu0 0.0
        %613 = vmatpush1.msra.mxu0 0.0
        %614 = vmatprep.subr.mxu0 0.0
        %615 = vmatpush1.msra.mxu0 0.0
        %616 = vmatprep.subr.mxu0 0.0
        %617 = vmatpush1.msra.mxu0 0.0
        %618 = vmatprep.mubr.f32.mxu0 0.0
        %619 = vmatmul.mubr.f32.gmra.mrb[0].mxu0 %v552
        %v620 = vpop.f32.mrb[0].mxu0
        %v621 = vadd.f32 %v549, %v620
        %v622 = vpop.f32.mrb[0].mxu0
        %623 = vdwg.mxu0
        %v624 = vmax.f32 %v621, 0.0
        %v625 = vld [vmem:[%s6] sm:$0xff]
        %v626 = vld [vmem:[%s6 + $0x8] sm:$0xff]
        %v627 = vld [vmem:[%s6 + $0x10] sm:$0xff]
        %v628 = vld [vmem:[%s6 + $0x18] sm:$0xff]
        %v629 = vld [vmem:[%s7] sm:$0x1]
        %v631 = vlaneseq
        %v632 = vshrl.u32 %v631, 7
        %v633 = vsub.s32 0, %v632
        %v634 = vrot.slane %v629, %v633
        %v637 = vsel %vm364, %v624, 0
        %639 = vmatprep.subr.mxu0 0.0
        %640 = vmatpush1.msra.mxu0 %v625
        %641 = vmatprep.subr.mxu0 0.0
        %642 = vmatpush1.msra.mxu0 %v626
        %643 = vmatprep.subr.mxu0 0.0
        %644 = vmatpush1.msra.mxu0 %v627
        %645 = vmatprep.subr.mxu0 0.0
        %646 = vmatpush1.msra.mxu0 %v628
        %647 = vmatprep.subr.mxu0 0.0
        %648 = vmatpush1.msra.mxu0 0.0
        %649 = vmatprep.subr.mxu0 0.0
        %650 = vmatpush1.msra.mxu0 0.0
        %651 = vmatprep.subr.mxu0 0.0
        %652 = vmatpush1.msra.mxu0 0.0
        %653 = vmatprep.subr.mxu0 0.0
        %654 = vmatpush1.msra.mxu0 0.0
        %655 = vmatprep.subr.mxu0 0.0
        %656 = vmatpush1.msra.mxu0 0.0
        %657 = vmatprep.subr.mxu0 0.0
        %658 = vmatpush1.msra.mxu0 0.0
        %659 = vmatprep.subr.mxu0 0.0
        %660 = vmatpush1.msra.mxu0 0.0
        %661 = vmatprep.subr.mxu0 0.0
        %662 = vmatpush1.msra.mxu0 0.0
        %663 = vmatprep.subr.mxu0 0.0
        %664 = vmatpush1.msra.mxu0 0.0
        %665 = vmatprep.subr.mxu0 0.0
        %666 = vmatpush1.msra.mxu0 0.0
        %667 = vmatprep.subr.mxu0 0.0
        %668 = vmatpush1.msra.mxu0 0.0
        %669 = vmatprep.subr.mxu0 0.0
        %670 = vmatpush1.msra.mxu0 0.0
        %671 = vmatprep.subr.mxu0 0.0
        %672 = vmatpush1.msra.mxu0 0.0
        %673 = vmatprep.subr.mxu0 0.0
        %674 = vmatpush1.msra.mxu0 0.0
        %675 = vmatprep.subr.mxu0 0.0
        %676 = vmatpush1.msra.mxu0 0.0
        %677 = vmatprep.subr.mxu0 0.0
        %678 = vmatpush1.msra.mxu0 0.0
        %679 = vmatprep.subr.mxu0 0.0
        %680 = vmatpush1.msra.mxu0 0.0
        %681 = vmatprep.subr.mxu0 0.0
        %682 = vmatpush1.msra.mxu0 0.0
        %683 = vmatprep.subr.mxu0 0.0
        %684 = vmatpush1.msra.mxu0 0.0
        %685 = vmatprep.subr.mxu0 0.0
        %686 = vmatpush1.msra.mxu0 0.0
        %687 = vmatprep.subr.mxu0 0.0
        %688 = vmatpush1.msra.mxu0 0.0
        %689 = vmatprep.subr.mxu0 0.0
        %690 = vmatpush1.msra.mxu0 0.0
        %691 = vmatprep.subr.mxu0 0.0
        %692 = vmatpush1.msra.mxu0 0.0
        %693 = vmatprep.subr.mxu0 0.0
        %694 = vmatpush1.msra.mxu0 0.0
        %695 = vmatprep.subr.mxu0 0.0
        %696 = vmatpush1.msra.mxu0 0.0
        %697 = vmatprep.subr.mxu0 0.0
        %698 = vmatpush1.msra.mxu0 0.0
        %699 = vmatprep.subr.mxu0 0.0
        %700 = vmatpush1.msra.mxu0 0.0
        %701 = vmatprep.subr.mxu0 0.0
        %702 = vmatpush1.msra.mxu0 0.0
        %703 = vmatprep.mubr.f32.mxu0 0.0
        %704 = vmatmul.mubr.f32.gmra.mrb[0].mxu0 %v637
        %v705 = vpop.f32.mrb[0].mxu0
        %v706 = vadd.f32 %v634, %v705
        %v707 = vpop.f32.mrb[0].mxu0
        %708 = vdwg.mxu0
        %709 = vst [vmem:[%s296] sm:$0xff] %v706
        %s710 = sand.u32 %s203, 1
        %s711 = scalar_lea.sflag [#allocation3], %s710
        %s712 = sand.u32 %s203, 1
        %s713 = smul.addr %s712, 8
        %s714 = scalar_lea.vmem [#allocation2], %s713
        // Predicated region
        $region53: #{tpu_custom_call.1} parent=51 // pred_check
          %p715 = pneg %p213
        $region54: #{tpu_custom_call.1} parent=51 // pred_check_branch
          %717 = sbr.rel (%p715) target = $region56
        $region55: #{tpu_custom_call.1} parent=51 // pred_region
          %s719 = ssub.s32 128, 128
          %720 = vsyncadd %s711, %s719
          %s721 = smul.addr %s22, 128
          %s722 = scalar_lea.hbm %s8, %s721
          %s724 = sshll.u32 %s714, 4
          %s725 = int_to_ptr.vmem [resolvable:$true] %s724
          %727 = dma.vmem_to_hbm [thread:$0]  %s725, 128, %s722, %s711
        $region56: #{tpu_custom_call.1} parent=51 // pred_fallthru
          _
      $region52: #{tpu_custom_call.1} parent=5 // pred_fallthru
        _
      %p728 = scmp.le.s32.totalorder 2, %s17
      // Predicated region
      $region57: #{tpu_custom_call.1} parent=5 // pred_check
        %p729 = pneg %p728
      $region58: #{tpu_custom_call.1} parent=5 // pred_check_branch
        %731 = sbr.rel (%p729) target = $region60
      $region59: #{tpu_custom_call.1} parent=5 // pred_region
        %s732 = ssub.s32 %s17, 2
        // Predicated region
        $region61: #{tpu_custom_call.1} parent=59 // pred_check
          %p733 = pneg %p219
        $region62: #{tpu_custom_call.1} parent=59 // pred_check_branch
          %735 = sbr.rel (%p733) target = $region64
        $region63: #{tpu_custom_call.1} parent=59 // pred_region
          %s736 = sand.u32 %s204, 1
          %s737 = scalar_lea.sflag [#allocation3], %s736
          %s738 = sand.u32 %s204, 1
          %s739 = smul.addr %s738, 8
          %s740 = scalar_lea.vmem [#allocation2], %s739
          %741 = dma.done %s737, 128
        $region64: #{tpu_custom_call.1} parent=59 // pred_fallthru
          _
      $region60: #{tpu_custom_call.1} parent=5 // pred_fallthru
        _
    $region6: #{tpu_custom_call.1} parent=1 // loop_footer
      %s21 = sadd.s32 1, %s17
    $region7: #{tpu_custom_call.1} parent=1 // loop_footer_branch
      %16 = sbr.rel target = $region3
    $region8: #{tpu_custom_call.1} parent=1 // loop_exit
      _
    %742 = vsyncpa [#allocation3], 1
    %s743 = scalar_lea.sflag [#allocation3], 1
    %744 = vsyncpa %s743, 1

</llo_original>
